<compile_context>
chip_gen: v5e
topology: v5e:2x2
jax: 0.10.0
libtpu: 0.0.40
codegen_flags: <defaults>
</compile_context>

<pallas_src>
import jax
import jax.numpy as jnp
from jax import lax
from jax.experimental import pallas as pl
from jax.experimental.pallas import tpu as pltpu


_NUM_DMA_SLOTS = 8  # outstanding gather DMAs kept in flight per grid step


def _pick_token_block(seq_len: int) -> int:
    """Largest sublane-aligned token block that divides the sequence length."""
    for ts in (512, 256, 128, 64, 32, 16, 8):
        if seq_len % ts == 0:
            return ts
    return seq_len  # full-extent fallback (still a legal block shape)


def _make_embed_kernel(ts: int, n_slots: int):
    """Build the kernel body for a token block of `ts` tokens."""

    def kernel(ids_ref, wte_hbm, wpe_ref, out_ref, gather_buf, sems):
        # ids_ref:    (B, S) int32 in SMEM (scalar prefetch)
        # wte_hbm:    (V, D) raw HBM ref (memory_space=pl.ANY)
        # wpe_ref:    (P, D) VMEM-resident position table
        # out_ref:    (1, ts, D) output slab
        # gather_buf: (ts, D) VMEM scratch for the gathered token rows
        # sems:       (n_slots,) DMA semaphores
        b = pl.program_id(0)
        sblk = pl.program_id(1)
        base = sblk * ts

        def start_copy(t, slot):
            row = ids_ref[b, base + t]
            pltpu.make_async_copy(
                wte_hbm.at[pl.ds(row, 1), :],
                gather_buf.at[pl.ds(t, 1), :],
                sems.at[slot],
            ).start()

        def wait_copy(t, slot):
            # Source index is irrelevant for wait (only the byte count matters).
            pltpu.make_async_copy(
                wte_hbm.at[pl.ds(0, 1), :],
                gather_buf.at[pl.ds(t, 1), :],
                sems.at[slot],
            ).wait()

        # Prime the pipeline with up to n_slots outstanding row copies.
        n_prime = min(n_slots, ts)
        for t in range(n_prime):  # static, short
            start_copy(t, t)

        # Rolling wait + refill: always keep n_slots DMAs in flight.
        def roll_body(t, carry):
            slot = t % n_slots
            wait_copy(t, slot)

            @pl.when(t + n_slots < ts)
            def _():
                start_copy(t + n_slots, slot)

            return carry

        lax.fori_loop(0, ts, roll_body, 0, unroll=(ts <= 32))

        # All ts rows gathered: add the position rows and store the dense slab.
        tok = gather_buf[...]
        pos = wpe_ref[pl.ds(pl.multiple_of(base, ts), ts), :]
        out_ref[...] = (tok + pos).reshape(out_ref.shape).astype(out_ref.dtype)

    return kernel


def gpt2_embeddings_forward(input_ids, wte, wpe, *, token_block=None,
                            num_dma_slots=_NUM_DMA_SLOTS):
    """input_ids: int (..., S); wte: (V, D); wpe: (P, D). Returns (B_flat, S, D)."""
    S = input_ids.shape[-1]
    ids2d = input_ids.reshape(-1, S).astype(jnp.int32)   # mirrors .view(-1, S)
    B = ids2d.shape[0]
    V, D = wte.shape
    P, Dp = wpe.shape
    assert D == Dp
    assert S <= P, "sequence length exceeds n_positions"

    # Guard against out-of-range ids becoming arbitrary HBM gather addresses.
    ids2d = jnp.clip(ids2d, 0, V - 1)

    ts = token_block or _pick_token_block(S)
    assert S % ts == 0, "token block must divide sequence length"
    n_sblk = S // ts

    kernel = _make_embed_kernel(ts, num_dma_slots)

    grid_spec = pltpu.PrefetchScalarGridSpec(
        num_scalar_prefetch=1,          # ids2d -> SMEM, visible to the kernel
        grid=(B, n_sblk),
        in_specs=[
            # Token-embedding table stays in HBM; rows are gathered manually.
            pl.BlockSpec(memory_space=pl.ANY),
            # Position-embedding table: constant block index -> DMA'd once,
            # stays VMEM-resident across the whole grid.
            pl.BlockSpec((P, D), lambda b, sblk, ids: (0, 0)),
        ],
        out_specs=pl.BlockSpec((1, ts, D), lambda b, sblk, ids: (b, sblk, 0)),
        scratch_shapes=[
            pltpu.VMEM((ts, D), wte.dtype),
            pltpu.SemaphoreType.DMA((num_dma_slots,)),
        ],
    )

    # TODO(synk): optionally cast wte/wpe/output to bfloat16 in callers to halve
    # HBM traffic (kept float32 here to match the PyTorch module exactly).
    return pl.pallas_call(
        kernel,
        grid_spec=grid_spec,
        out_shape=jax.ShapeDtypeStruct((B, S, D), wte.dtype),
        compiler_params=pltpu.CompilerParams(
            dimension_semantics=("parallel", "parallel"),
        ),
    )(ids2d, wte, wpe)


def gpt2_embeddings_reference(input_ids, wte, wpe):
    S = input_ids.shape[-1]
    ids2d = input_ids.reshape(-1, S)
    pos = jnp.arange(S, dtype=jnp.int32)
    return wte[ids2d] + wpe[pos][None, :, :]


if __name__ == "__main__":
    # Small synthetic GPT2 config.
    vocab_size = 64
    n_positions = 16
    n_embd = 128          # lane-aligned hidden size
    batch = 2
    seq = 8

    key = jax.random.PRNGKey(0)
    k_ids, k_wte, k_wpe = jax.random.split(key, 3)

    # Deterministic "parameters" (GPT2-style N(0, 0.02) init).
    wte = (0.02 * jax.random.normal(k_wte, (vocab_size, n_embd))).astype(jnp.float32)
    wpe = (0.02 * jax.random.normal(k_wpe, (n_positions, n_embd))).astype(jnp.float32)

    input_ids = jax.random.randint(k_ids, (batch, seq), 0, vocab_size, dtype=jnp.int32)

    out = gpt2_embeddings_forward(input_ids, wte, wpe)
    out = jax.block_until_ready(out)

    ref = gpt2_embeddings_reference(input_ids, wte, wpe)
    assert out.shape == (batch, seq, n_embd)
    assert jnp.allclose(out, ref, atol=1e-6, rtol=1e-6)

    print("KERNEL_OK")
</pallas_src>

<mosaic_0001>
module attributes {stable_mosaic.version = 11 : i64} {
  func.func @kernel(%arg0: i32, %arg1: i32, %arg2: memref<2x8xi32, #tpu.memory_space<smem>>, %arg3: memref<64x128xf32, #tpu.memory_space<any>>, %arg4: memref<16x128xf32, #tpu.memory_space<vmem>>, %arg5: memref<1x8x128xf32, #tpu.memory_space<vmem>>, %arg6: memref<8x128xf32, #tpu.memory_space<vmem>>, %arg7: memref<8x!tpu.dma_semaphore, #tpu.memory_space<semaphore_mem>>) attributes {dimension_semantics = [#tpu.dimension_semantics<parallel>, #tpu.dimension_semantics<parallel>], iteration_bounds = array<i64: 2, 1>, scalar_prefetch = 1 : i64, scratch_operands = 2 : i64, tpu.core_type = #tpu.core_type<tc>, window_params = [{}, {pipeline_mode = #tpu.pipeline_mode<synchronous>, transform_indices = @transform_1, window_bounds = array<i64: 16, 128>}, {transform_indices = @transform_2, window_bounds = array<i64: 1, 8, 128>}]} {
    %c8_i32 = arith.constant 8 : i32
    %0 = arith.muli %arg1, %c8_i32 : i32
    %c0_i32 = arith.constant 0 : i32
    %1 = arith.addi %0, %c0_i32 : i32
    %2 = arith.index_cast %arg0 : i32 to index
    %3 = arith.index_cast %1 : i32 to index
    %4 = memref.load %arg2[%2, %3] : memref<2x8xi32, #tpu.memory_space<smem>>
    %c0_i32_0 = arith.constant 0 : i32
    %c0_i32_1 = arith.constant 0 : i32
    %5 = tpu.memref_slice %arg3[%4, %c0_i32_1] : memref<64x128xf32, #tpu.memory_space<any>> -> memref<1x128xf32, #tpu.memory_space<any>>
    %c0_i32_2 = arith.constant 0 : i32
    %c0_i32_3 = arith.constant 0 : i32
    %6 = tpu.memref_slice %arg6[%c0_i32_2, %c0_i32_3] : memref<8x128xf32, #tpu.memory_space<vmem>> -> memref<1x128xf32, #tpu.memory_space<vmem>>
    %7 = tpu.memref_slice %arg7[%c0_i32_0] : memref<8x!tpu.dma_semaphore, #tpu.memory_space<semaphore_mem>> -> memref<1x!tpu.dma_semaphore, #tpu.memory_space<semaphore_mem>>
    %8 = tpu.memref_squeeze %7 : memref<1x!tpu.dma_semaphore, #tpu.memory_space<semaphore_mem>> -> memref<!tpu.dma_semaphore, #tpu.memory_space<semaphore_mem>>
    tpu.enqueue_dma source(%5 : memref<1x128xf32, #tpu.memory_space<any>>) target(%6 : memref<1x128xf32, #tpu.memory_space<vmem>>) target_semaphore(%8 : memref<!tpu.dma_semaphore, #tpu.memory_space<semaphore_mem>>)
    %c1_i32 = arith.constant 1 : i32
    %9 = arith.addi %0, %c1_i32 : i32
    %10 = arith.index_cast %arg0 : i32 to index
    %11 = arith.index_cast %9 : i32 to index
    %12 = memref.load %arg2[%10, %11] : memref<2x8xi32, #tpu.memory_space<smem>>
    %c1_i32_4 = arith.constant 1 : i32
    %c0_i32_5 = arith.constant 0 : i32
    %13 = tpu.memref_slice %arg3[%12, %c0_i32_5] : memref<64x128xf32, #tpu.memory_space<any>> -> memref<1x128xf32, #tpu.memory_space<any>>
    %c1_i32_6 = arith.constant 1 : i32
    %c0_i32_7 = arith.constant 0 : i32
    %14 = tpu.memref_slice %arg6[%c1_i32_6, %c0_i32_7] : memref<8x128xf32, #tpu.memory_space<vmem>> -> memref<1x128xf32, #tpu.memory_space<vmem>>
    %15 = tpu.memref_slice %arg7[%c1_i32_4] : memref<8x!tpu.dma_semaphore, #tpu.memory_space<semaphore_mem>> -> memref<1x!tpu.dma_semaphore, #tpu.memory_space<semaphore_mem>>
    %16 = tpu.memref_squeeze %15 : memref<1x!tpu.dma_semaphore, #tpu.memory_space<semaphore_mem>> -> memref<!tpu.dma_semaphore, #tpu.memory_space<semaphore_mem>>
    tpu.enqueue_dma source(%13 : memref<1x128xf32, #tpu.memory_space<any>>) target(%14 : memref<1x128xf32, #tpu.memory_space<vmem>>) target_semaphore(%16 : memref<!tpu.dma_semaphore, #tpu.memory_space<semaphore_mem>>)
    %c2_i32 = arith.constant 2 : i32
    %17 = arith.addi %0, %c2_i32 : i32
    %18 = arith.index_cast %arg0 : i32 to index
    %19 = arith.index_cast %17 : i32 to index
    %20 = memref.load %arg2[%18, %19] : memref<2x8xi32, #tpu.memory_space<smem>>
    %c2_i32_8 = arith.constant 2 : i32
    %c0_i32_9 = arith.constant 0 : i32
    %21 = tpu.memref_slice %arg3[%20, %c0_i32_9] : memref<64x128xf32, #tpu.memory_space<any>> -> memref<1x128xf32, #tpu.memory_space<any>>
    %c2_i32_10 = arith.constant 2 : i32
    %c0_i32_11 = arith.constant 0 : i32
    %22 = tpu.memref_slice %arg6[%c2_i32_10, %c0_i32_11] : memref<8x128xf32, #tpu.memory_space<vmem>> -> memref<1x128xf32, #tpu.memory_space<vmem>>
    %23 = tpu.memref_slice %arg7[%c2_i32_8] : memref<8x!tpu.dma_semaphore, #tpu.memory_space<semaphore_mem>> -> memref<1x!tpu.dma_semaphore, #tpu.memory_space<semaphore_mem>>
    %24 = tpu.memref_squeeze %23 : memref<1x!tpu.dma_semaphore, #tpu.memory_space<semaphore_mem>> -> memref<!tpu.dma_semaphore, #tpu.memory_space<semaphore_mem>>
    tpu.enqueue_dma source(%21 : memref<1x128xf32, #tpu.memory_space<any>>) target(%22 : memref<1x128xf32, #tpu.memory_space<vmem>>) target_semaphore(%24 : memref<!tpu.dma_semaphore, #tpu.memory_space<semaphore_mem>>)
    %c3_i32 = arith.constant 3 : i32
    %25 = arith.addi %0, %c3_i32 : i32
    %26 = arith.index_cast %arg0 : i32 to index
    %27 = arith.index_cast %25 : i32 to index
    %28 = memref.load %arg2[%26, %27] : memref<2x8xi32, #tpu.memory_space<smem>>
    %c3_i32_12 = arith.constant 3 : i32
    %c0_i32_13 = arith.constant 0 : i32
    %29 = tpu.memref_slice %arg3[%28, %c0_i32_13] : memref<64x128xf32, #tpu.memory_space<any>> -> memref<1x128xf32, #tpu.memory_space<any>>
    %c3_i32_14 = arith.constant 3 : i32
    %c0_i32_15 = arith.constant 0 : i32
    %30 = tpu.memref_slice %arg6[%c3_i32_14, %c0_i32_15] : memref<8x128xf32, #tpu.memory_space<vmem>> -> memref<1x128xf32, #tpu.memory_space<vmem>>
    %31 = tpu.memref_slice %arg7[%c3_i32_12] : memref<8x!tpu.dma_semaphore, #tpu.memory_space<semaphore_mem>> -> memref<1x!tpu.dma_semaphore, #tpu.memory_space<semaphore_mem>>
    %32 = tpu.memref_squeeze %31 : memref<1x!tpu.dma_semaphore, #tpu.memory_space<semaphore_mem>> -> memref<!tpu.dma_semaphore, #tpu.memory_space<semaphore_mem>>
    tpu.enqueue_dma source(%29 : memref<1x128xf32, #tpu.memory_space<any>>) target(%30 : memref<1x128xf32, #tpu.memory_space<vmem>>) target_semaphore(%32 : memref<!tpu.dma_semaphore, #tpu.memory_space<semaphore_mem>>)
    %c4_i32 = arith.constant 4 : i32
    %33 = arith.addi %0, %c4_i32 : i32
    %34 = arith.index_cast %arg0 : i32 to index
    %35 = arith.index_cast %33 : i32 to index
    %36 = memref.load %arg2[%34, %35] : memref<2x8xi32, #tpu.memory_space<smem>>
    %c4_i32_16 = arith.constant 4 : i32
    %c0_i32_17 = arith.constant 0 : i32
    %37 = tpu.memref_slice %arg3[%36, %c0_i32_17] : memref<64x128xf32, #tpu.memory_space<any>> -> memref<1x128xf32, #tpu.memory_space<any>>
    %c4_i32_18 = arith.constant 4 : i32
    %c0_i32_19 = arith.constant 0 : i32
    %38 = tpu.memref_slice %arg6[%c4_i32_18, %c0_i32_19] : memref<8x128xf32, #tpu.memory_space<vmem>> -> memref<1x128xf32, #tpu.memory_space<vmem>>
    %39 = tpu.memref_slice %arg7[%c4_i32_16] : memref<8x!tpu.dma_semaphore, #tpu.memory_space<semaphore_mem>> -> memref<1x!tpu.dma_semaphore, #tpu.memory_space<semaphore_mem>>
    %40 = tpu.memref_squeeze %39 : memref<1x!tpu.dma_semaphore, #tpu.memory_space<semaphore_mem>> -> memref<!tpu.dma_semaphore, #tpu.memory_space<semaphore_mem>>
    tpu.enqueue_dma source(%37 : memref<1x128xf32, #tpu.memory_space<any>>) target(%38 : memref<1x128xf32, #tpu.memory_space<vmem>>) target_semaphore(%40 : memref<!tpu.dma_semaphore, #tpu.memory_space<semaphore_mem>>)
    %c5_i32 = arith.constant 5 : i32
    %41 = arith.addi %0, %c5_i32 : i32
    %42 = arith.index_cast %arg0 : i32 to index
    %43 = arith.index_cast %41 : i32 to index
    %44 = memref.load %arg2[%42, %43] : memref<2x8xi32, #tpu.memory_space<smem>>
    %c5_i32_20 = arith.constant 5 : i32
    %c0_i32_21 = arith.constant 0 : i32
    %45 = tpu.memref_slice %arg3[%44, %c0_i32_21] : memref<64x128xf32, #tpu.memory_space<any>> -> memref<1x128xf32, #tpu.memory_space<any>>
    %c5_i32_22 = arith.constant 5 : i32
    %c0_i32_23 = arith.constant 0 : i32
    %46 = tpu.memref_slice %arg6[%c5_i32_22, %c0_i32_23] : memref<8x128xf32, #tpu.memory_space<vmem>> -> memref<1x128xf32, #tpu.memory_space<vmem>>
    %47 = tpu.memref_slice %arg7[%c5_i32_20] : memref<8x!tpu.dma_semaphore, #tpu.memory_space<semaphore_mem>> -> memref<1x!tpu.dma_semaphore, #tpu.memory_space<semaphore_mem>>
    %48 = tpu.memref_squeeze %47 : memref<1x!tpu.dma_semaphore, #tpu.memory_space<semaphore_mem>> -> memref<!tpu.dma_semaphore, #tpu.memory_space<semaphore_mem>>
    tpu.enqueue_dma source(%45 : memref<1x128xf32, #tpu.memory_space<any>>) target(%46 : memref<1x128xf32, #tpu.memory_space<vmem>>) target_semaphore(%48 : memref<!tpu.dma_semaphore, #tpu.memory_space<semaphore_mem>>)
    %c6_i32 = arith.constant 6 : i32
    %49 = arith.addi %0, %c6_i32 : i32
    %50 = arith.index_cast %arg0 : i32 to index
    %51 = arith.index_cast %49 : i32 to index
    %52 = memref.load %arg2[%50, %51] : memref<2x8xi32, #tpu.memory_space<smem>>
    %c6_i32_24 = arith.constant 6 : i32
    %c0_i32_25 = arith.constant 0 : i32
    %53 = tpu.memref_slice %arg3[%52, %c0_i32_25] : memref<64x128xf32, #tpu.memory_space<any>> -> memref<1x128xf32, #tpu.memory_space<any>>
    %c6_i32_26 = arith.constant 6 : i32
    %c0_i32_27 = arith.constant 0 : i32
    %54 = tpu.memref_slice %arg6[%c6_i32_26, %c0_i32_27] : memref<8x128xf32, #tpu.memory_space<vmem>> -> memref<1x128xf32, #tpu.memory_space<vmem>>
    %55 = tpu.memref_slice %arg7[%c6_i32_24] : memref<8x!tpu.dma_semaphore, #tpu.memory_space<semaphore_mem>> -> memref<1x!tpu.dma_semaphore, #tpu.memory_space<semaphore_mem>>
    %56 = tpu.memref_squeeze %55 : memref<1x!tpu.dma_semaphore, #tpu.memory_space<semaphore_mem>> -> memref<!tpu.dma_semaphore, #tpu.memory_space<semaphore_mem>>
    tpu.enqueue_dma source(%53 : memref<1x128xf32, #tpu.memory_space<any>>) target(%54 : memref<1x128xf32, #tpu.memory_space<vmem>>) target_semaphore(%56 : memref<!tpu.dma_semaphore, #tpu.memory_space<semaphore_mem>>)
    %c7_i32 = arith.constant 7 : i32
    %57 = arith.addi %0, %c7_i32 : i32
    %58 = arith.index_cast %arg0 : i32 to index
    %59 = arith.index_cast %57 : i32 to index
    %60 = memref.load %arg2[%58, %59] : memref<2x8xi32, #tpu.memory_space<smem>>
    %c7_i32_28 = arith.constant 7 : i32
    %c0_i32_29 = arith.constant 0 : i32
    %61 = tpu.memref_slice %arg3[%60, %c0_i32_29] : memref<64x128xf32, #tpu.memory_space<any>> -> memref<1x128xf32, #tpu.memory_space<any>>
    %c7_i32_30 = arith.constant 7 : i32
    %c0_i32_31 = arith.constant 0 : i32
    %62 = tpu.memref_slice %arg6[%c7_i32_30, %c0_i32_31] : memref<8x128xf32, #tpu.memory_space<vmem>> -> memref<1x128xf32, #tpu.memory_space<vmem>>
    %63 = tpu.memref_slice %arg7[%c7_i32_28] : memref<8x!tpu.dma_semaphore, #tpu.memory_space<semaphore_mem>> -> memref<1x!tpu.dma_semaphore, #tpu.memory_space<semaphore_mem>>
    %64 = tpu.memref_squeeze %63 : memref<1x!tpu.dma_semaphore, #tpu.memory_space<semaphore_mem>> -> memref<!tpu.dma_semaphore, #tpu.memory_space<semaphore_mem>>
    tpu.enqueue_dma source(%61 : memref<1x128xf32, #tpu.memory_space<any>>) target(%62 : memref<1x128xf32, #tpu.memory_space<vmem>>) target_semaphore(%64 : memref<!tpu.dma_semaphore, #tpu.memory_space<semaphore_mem>>)
    %c0_i32_32 = arith.constant 0 : i32
    %c8_i32_33 = arith.constant 8 : i32
    %c0_i32_34 = arith.constant 0 : i32
    %65 = arith.cmpi eq, %c8_i32_33, %c0_i32_34 : i32
    %c1_i32_35 = arith.constant 1 : i32
    %66 = arith.select %65, %c1_i32_35, %c8_i32_33 : i32
    %67 = arith.remsi %c0_i32_32, %66 : i32
    %c0_i32_36 = arith.constant 0 : i32
    %68 = arith.cmpi ne, %67, %c0_i32_36 : i32
    %c0_i32_37 = arith.constant 0 : i32
    %69 = arith.cmpi slt, %67, %c0_i32_37 : i32
    %c0_i32_38 = arith.constant 0 : i32
    %70 = arith.cmpi slt, %66, %c0_i32_38 : i32
    %71 = arith.xori %69, %70 : i1
    %72 = arith.andi %71, %68 : i1
    %73 = arith.addi %67, %66 : i32
    %74 = arith.select %72, %73, %67 : i32
    %c0_i32_39 = arith.constant 0 : i32
    %c0_i32_40 = arith.constant 0 : i32
    %75 = tpu.memref_slice %arg3[%c0_i32_39, %c0_i32_40] : memref<64x128xf32, #tpu.memory_space<any>> -> memref<1x128xf32, #tpu.memory_space<any>>
    %c0_i32_41 = arith.constant 0 : i32
    %76 = tpu.memref_slice %arg6[%c0_i32_32, %c0_i32_41] : memref<8x128xf32, #tpu.memory_space<vmem>> -> memref<1x128xf32, #tpu.memory_space<vmem>>
    %77 = tpu.memref_slice %arg7[%74] : memref<8x!tpu.dma_semaphore, #tpu.memory_space<semaphore_mem>> -> memref<1x!tpu.dma_semaphore, #tpu.memory_space<semaphore_mem>>
    %78 = tpu.memref_squeeze %77 : memref<1x!tpu.dma_semaphore, #tpu.memory_space<semaphore_mem>> -> memref<!tpu.dma_semaphore, #tpu.memory_space<semaphore_mem>>
    tpu.wait_dma2 semaphore(%78 : memref<!tpu.dma_semaphore, #tpu.memory_space<semaphore_mem>>) src(%75 : memref<1x128xf32, #tpu.memory_space<any>>) dst(%76 : memref<1x128xf32, #tpu.memory_space<vmem>>)
    %c8_i32_42 = arith.constant 8 : i32
    %79 = arith.addi %c0_i32_32, %c8_i32_42 : i32
    %c8_i32_43 = arith.constant 8 : i32
    %80 = arith.cmpi slt, %79, %c8_i32_43 : i32
    %81 = arith.extui %80 : i1 to i32
    %c0_i32_44 = arith.constant 0 : i32
    %82 = arith.cmpi ne, %81, %c0_i32_44 : i32
    scf.if %82 {
      %c8_i32_142 = arith.constant 8 : i32
      %216 = arith.addi %c0_i32_32, %c8_i32_142 : i32
      %217 = arith.addi %0, %216 : i32
      %218 = arith.index_cast %arg0 : i32 to index
      %219 = arith.index_cast %217 : i32 to index
      %220 = memref.load %arg2[%218, %219] : memref<2x8xi32, #tpu.memory_space<smem>>
      %c0_i32_143 = arith.constant 0 : i32
      %221 = tpu.memref_slice %arg3[%220, %c0_i32_143] : memref<64x128xf32, #tpu.memory_space<any>> -> memref<1x128xf32, #tpu.memory_space<any>>
      %c0_i32_144 = arith.constant 0 : i32
      %222 = tpu.memref_slice %arg6[%216, %c0_i32_144] : memref<8x128xf32, #tpu.memory_space<vmem>> -> memref<1x128xf32, #tpu.memory_space<vmem>>
      %223 = tpu.memref_slice %arg7[%74] : memref<8x!tpu.dma_semaphore, #tpu.memory_space<semaphore_mem>> -> memref<1x!tpu.dma_semaphore, #tpu.memory_space<semaphore_mem>>
      %224 = tpu.memref_squeeze %223 : memref<1x!tpu.dma_semaphore, #tpu.memory_space<semaphore_mem>> -> memref<!tpu.dma_semaphore, #tpu.memory_space<semaphore_mem>>
      tpu.enqueue_dma source(%221 : memref<1x128xf32, #tpu.memory_space<any>>) target(%222 : memref<1x128xf32, #tpu.memory_space<vmem>>) target_semaphore(%224 : memref<!tpu.dma_semaphore, #tpu.memory_space<semaphore_mem>>)
    } else {
    }
    %c1_i32_45 = arith.constant 1 : i32
    %c8_i32_46 = arith.constant 8 : i32
    %c0_i32_47 = arith.constant 0 : i32
    %83 = arith.cmpi eq, %c8_i32_46, %c0_i32_47 : i32
    %c1_i32_48 = arith.constant 1 : i32
    %84 = arith.select %83, %c1_i32_48, %c8_i32_46 : i32
    %85 = arith.remsi %c1_i32_45, %84 : i32
    %c0_i32_49 = arith.constant 0 : i32
    %86 = arith.cmpi ne, %85, %c0_i32_49 : i32
    %c0_i32_50 = arith.constant 0 : i32
    %87 = arith.cmpi slt, %85, %c0_i32_50 : i32
    %c0_i32_51 = arith.constant 0 : i32
    %88 = arith.cmpi slt, %84, %c0_i32_51 : i32
    %89 = arith.xori %87, %88 : i1
    %90 = arith.andi %89, %86 : i1
    %91 = arith.addi %85, %84 : i32
    %92 = arith.select %90, %91, %85 : i32
    %c0_i32_52 = arith.constant 0 : i32
    %c0_i32_53 = arith.constant 0 : i32
    %93 = tpu.memref_slice %arg3[%c0_i32_52, %c0_i32_53] : memref<64x128xf32, #tpu.memory_space<any>> -> memref<1x128xf32, #tpu.memory_space<any>>
    %c0_i32_54 = arith.constant 0 : i32
    %94 = tpu.memref_slice %arg6[%c1_i32_45, %c0_i32_54] : memref<8x128xf32, #tpu.memory_space<vmem>> -> memref<1x128xf32, #tpu.memory_space<vmem>>
    %95 = tpu.memref_slice %arg7[%92] : memref<8x!tpu.dma_semaphore, #tpu.memory_space<semaphore_mem>> -> memref<1x!tpu.dma_semaphore, #tpu.memory_space<semaphore_mem>>
    %96 = tpu.memref_squeeze %95 : memref<1x!tpu.dma_semaphore, #tpu.memory_space<semaphore_mem>> -> memref<!tpu.dma_semaphore, #tpu.memory_space<semaphore_mem>>
    tpu.wait_dma2 semaphore(%96 : memref<!tpu.dma_semaphore, #tpu.memory_space<semaphore_mem>>) src(%93 : memref<1x128xf32, #tpu.memory_space<any>>) dst(%94 : memref<1x128xf32, #tpu.memory_space<vmem>>)
    %c8_i32_55 = arith.constant 8 : i32
    %97 = arith.addi %c1_i32_45, %c8_i32_55 : i32
    %c8_i32_56 = arith.constant 8 : i32
    %98 = arith.cmpi slt, %97, %c8_i32_56 : i32
    %99 = arith.extui %98 : i1 to i32
    %c0_i32_57 = arith.constant 0 : i32
    %100 = arith.cmpi ne, %99, %c0_i32_57 : i32
    scf.if %100 {
      %c8_i32_142 = arith.constant 8 : i32
      %216 = arith.addi %c1_i32_45, %c8_i32_142 : i32
      %217 = arith.addi %0, %216 : i32
      %218 = arith.index_cast %arg0 : i32 to index
      %219 = arith.index_cast %217 : i32 to index
      %220 = memref.load %arg2[%218, %219] : memref<2x8xi32, #tpu.memory_space<smem>>
      %c0_i32_143 = arith.constant 0 : i32
      %221 = tpu.memref_slice %arg3[%220, %c0_i32_143] : memref<64x128xf32, #tpu.memory_space<any>> -> memref<1x128xf32, #tpu.memory_space<any>>
      %c0_i32_144 = arith.constant 0 : i32
      %222 = tpu.memref_slice %arg6[%216, %c0_i32_144] : memref<8x128xf32, #tpu.memory_space<vmem>> -> memref<1x128xf32, #tpu.memory_space<vmem>>
      %223 = tpu.memref_slice %arg7[%92] : memref<8x!tpu.dma_semaphore, #tpu.memory_space<semaphore_mem>> -> memref<1x!tpu.dma_semaphore, #tpu.memory_space<semaphore_mem>>
      %224 = tpu.memref_squeeze %223 : memref<1x!tpu.dma_semaphore, #tpu.memory_space<semaphore_mem>> -> memref<!tpu.dma_semaphore, #tpu.memory_space<semaphore_mem>>
      tpu.enqueue_dma source(%221 : memref<1x128xf32, #tpu.memory_space<any>>) target(%222 : memref<1x128xf32, #tpu.memory_space<vmem>>) target_semaphore(%224 : memref<!tpu.dma_semaphore, #tpu.memory_space<semaphore_mem>>)
    } else {
    }
    %c2_i32_58 = arith.constant 2 : i32
    %c8_i32_59 = arith.constant 8 : i32
    %c0_i32_60 = arith.constant 0 : i32
    %101 = arith.cmpi eq, %c8_i32_59, %c0_i32_60 : i32
    %c1_i32_61 = arith.constant 1 : i32
    %102 = arith.select %101, %c1_i32_61, %c8_i32_59 : i32
    %103 = arith.remsi %c2_i32_58, %102 : i32
    %c0_i32_62 = arith.constant 0 : i32
    %104 = arith.cmpi ne, %103, %c0_i32_62 : i32
    %c0_i32_63 = arith.constant 0 : i32
    %105 = arith.cmpi slt, %103, %c0_i32_63 : i32
    %c0_i32_64 = arith.constant 0 : i32
    %106 = arith.cmpi slt, %102, %c0_i32_64 : i32
    %107 = arith.xori %105, %106 : i1
    %108 = arith.andi %107, %104 : i1
    %109 = arith.addi %103, %102 : i32
    %110 = arith.select %108, %109, %103 : i32
    %c0_i32_65 = arith.constant 0 : i32
    %c0_i32_66 = arith.constant 0 : i32
    %111 = tpu.memref_slice %arg3[%c0_i32_65, %c0_i32_66] : memref<64x128xf32, #tpu.memory_space<any>> -> memref<1x128xf32, #tpu.memory_space<any>>
    %c0_i32_67 = arith.constant 0 : i32
    %112 = tpu.memref_slice %arg6[%c2_i32_58, %c0_i32_67] : memref<8x128xf32, #tpu.memory_space<vmem>> -> memref<1x128xf32, #tpu.memory_space<vmem>>
    %113 = tpu.memref_slice %arg7[%110] : memref<8x!tpu.dma_semaphore, #tpu.memory_space<semaphore_mem>> -> memref<1x!tpu.dma_semaphore, #tpu.memory_space<semaphore_mem>>
    %114 = tpu.memref_squeeze %113 : memref<1x!tpu.dma_semaphore, #tpu.memory_space<semaphore_mem>> -> memref<!tpu.dma_semaphore, #tpu.memory_space<semaphore_mem>>
    tpu.wait_dma2 semaphore(%114 : memref<!tpu.dma_semaphore, #tpu.memory_space<semaphore_mem>>) src(%111 : memref<1x128xf32, #tpu.memory_space<any>>) dst(%112 : memref<1x128xf32, #tpu.memory_space<vmem>>)
    %c8_i32_68 = arith.constant 8 : i32
    %115 = arith.addi %c2_i32_58, %c8_i32_68 : i32
    %c8_i32_69 = arith.constant 8 : i32
    %116 = arith.cmpi slt, %115, %c8_i32_69 : i32
    %117 = arith.extui %116 : i1 to i32
    %c0_i32_70 = arith.constant 0 : i32
    %118 = arith.cmpi ne, %117, %c0_i32_70 : i32
    scf.if %118 {
      %c8_i32_142 = arith.constant 8 : i32
      %216 = arith.addi %c2_i32_58, %c8_i32_142 : i32
      %217 = arith.addi %0, %216 : i32
      %218 = arith.index_cast %arg0 : i32 to index
      %219 = arith.index_cast %217 : i32 to index
      %220 = memref.load %arg2[%218, %219] : memref<2x8xi32, #tpu.memory_space<smem>>
      %c0_i32_143 = arith.constant 0 : i32
      %221 = tpu.memref_slice %arg3[%220, %c0_i32_143] : memref<64x128xf32, #tpu.memory_space<any>> -> memref<1x128xf32, #tpu.memory_space<any>>
      %c0_i32_144 = arith.constant 0 : i32
      %222 = tpu.memref_slice %arg6[%216, %c0_i32_144] : memref<8x128xf32, #tpu.memory_space<vmem>> -> memref<1x128xf32, #tpu.memory_space<vmem>>
      %223 = tpu.memref_slice %arg7[%110] : memref<8x!tpu.dma_semaphore, #tpu.memory_space<semaphore_mem>> -> memref<1x!tpu.dma_semaphore, #tpu.memory_space<semaphore_mem>>
      %224 = tpu.memref_squeeze %223 : memref<1x!tpu.dma_semaphore, #tpu.memory_space<semaphore_mem>> -> memref<!tpu.dma_semaphore, #tpu.memory_space<semaphore_mem>>
      tpu.enqueue_dma source(%221 : memref<1x128xf32, #tpu.memory_space<any>>) target(%222 : memref<1x128xf32, #tpu.memory_space<vmem>>) target_semaphore(%224 : memref<!tpu.dma_semaphore, #tpu.memory_space<semaphore_mem>>)
    } else {
    }
    %c3_i32_71 = arith.constant 3 : i32
    %c8_i32_72 = arith.constant 8 : i32
    %c0_i32_73 = arith.constant 0 : i32
    %119 = arith.cmpi eq, %c8_i32_72, %c0_i32_73 : i32
    %c1_i32_74 = arith.constant 1 : i32
    %120 = arith.select %119, %c1_i32_74, %c8_i32_72 : i32
    %121 = arith.remsi %c3_i32_71, %120 : i32
    %c0_i32_75 = arith.constant 0 : i32
    %122 = arith.cmpi ne, %121, %c0_i32_75 : i32
    %c0_i32_76 = arith.constant 0 : i32
    %123 = arith.cmpi slt, %121, %c0_i32_76 : i32
    %c0_i32_77 = arith.constant 0 : i32
    %124 = arith.cmpi slt, %120, %c0_i32_77 : i32
    %125 = arith.xori %123, %124 : i1
    %126 = arith.andi %125, %122 : i1
    %127 = arith.addi %121, %120 : i32
    %128 = arith.select %126, %127, %121 : i32
    %c0_i32_78 = arith.constant 0 : i32
    %c0_i32_79 = arith.constant 0 : i32
    %129 = tpu.memref_slice %arg3[%c0_i32_78, %c0_i32_79] : memref<64x128xf32, #tpu.memory_space<any>> -> memref<1x128xf32, #tpu.memory_space<any>>
    %c0_i32_80 = arith.constant 0 : i32
    %130 = tpu.memref_slice %arg6[%c3_i32_71, %c0_i32_80] : memref<8x128xf32, #tpu.memory_space<vmem>> -> memref<1x128xf32, #tpu.memory_space<vmem>>
    %131 = tpu.memref_slice %arg7[%128] : memref<8x!tpu.dma_semaphore, #tpu.memory_space<semaphore_mem>> -> memref<1x!tpu.dma_semaphore, #tpu.memory_space<semaphore_mem>>
    %132 = tpu.memref_squeeze %131 : memref<1x!tpu.dma_semaphore, #tpu.memory_space<semaphore_mem>> -> memref<!tpu.dma_semaphore, #tpu.memory_space<semaphore_mem>>
    tpu.wait_dma2 semaphore(%132 : memref<!tpu.dma_semaphore, #tpu.memory_space<semaphore_mem>>) src(%129 : memref<1x128xf32, #tpu.memory_space<any>>) dst(%130 : memref<1x128xf32, #tpu.memory_space<vmem>>)
    %c8_i32_81 = arith.constant 8 : i32
    %133 = arith.addi %c3_i32_71, %c8_i32_81 : i32
    %c8_i32_82 = arith.constant 8 : i32
    %134 = arith.cmpi slt, %133, %c8_i32_82 : i32
    %135 = arith.extui %134 : i1 to i32
    %c0_i32_83 = arith.constant 0 : i32
    %136 = arith.cmpi ne, %135, %c0_i32_83 : i32
    scf.if %136 {
      %c8_i32_142 = arith.constant 8 : i32
      %216 = arith.addi %c3_i32_71, %c8_i32_142 : i32
      %217 = arith.addi %0, %216 : i32
      %218 = arith.index_cast %arg0 : i32 to index
      %219 = arith.index_cast %217 : i32 to index
      %220 = memref.load %arg2[%218, %219] : memref<2x8xi32, #tpu.memory_space<smem>>
      %c0_i32_143 = arith.constant 0 : i32
      %221 = tpu.memref_slice %arg3[%220, %c0_i32_143] : memref<64x128xf32, #tpu.memory_space<any>> -> memref<1x128xf32, #tpu.memory_space<any>>
      %c0_i32_144 = arith.constant 0 : i32
      %222 = tpu.memref_slice %arg6[%216, %c0_i32_144] : memref<8x128xf32, #tpu.memory_space<vmem>> -> memref<1x128xf32, #tpu.memory_space<vmem>>
      %223 = tpu.memref_slice %arg7[%128] : memref<8x!tpu.dma_semaphore, #tpu.memory_space<semaphore_mem>> -> memref<1x!tpu.dma_semaphore, #tpu.memory_space<semaphore_mem>>
      %224 = tpu.memref_squeeze %223 : memref<1x!tpu.dma_semaphore, #tpu.memory_space<semaphore_mem>> -> memref<!tpu.dma_semaphore, #tpu.memory_space<semaphore_mem>>
      tpu.enqueue_dma source(%221 : memref<1x128xf32, #tpu.memory_space<any>>) target(%222 : memref<1x128xf32, #tpu.memory_space<vmem>>) target_semaphore(%224 : memref<!tpu.dma_semaphore, #tpu.memory_space<semaphore_mem>>)
    } else {
    }
    %c4_i32_84 = arith.constant 4 : i32
    %c8_i32_85 = arith.constant 8 : i32
    %c0_i32_86 = arith.constant 0 : i32
    %137 = arith.cmpi eq, %c8_i32_85, %c0_i32_86 : i32
    %c1_i32_87 = arith.constant 1 : i32
    %138 = arith.select %137, %c1_i32_87, %c8_i32_85 : i32
    %139 = arith.remsi %c4_i32_84, %138 : i32
    %c0_i32_88 = arith.constant 0 : i32
    %140 = arith.cmpi ne, %139, %c0_i32_88 : i32
    %c0_i32_89 = arith.constant 0 : i32
    %141 = arith.cmpi slt, %139, %c0_i32_89 : i32
    %c0_i32_90 = arith.constant 0 : i32
    %142 = arith.cmpi slt, %138, %c0_i32_90 : i32
    %143 = arith.xori %141, %142 : i1
    %144 = arith.andi %143, %140 : i1
    %145 = arith.addi %139, %138 : i32
    %146 = arith.select %144, %145, %139 : i32
    %c0_i32_91 = arith.constant 0 : i32
    %c0_i32_92 = arith.constant 0 : i32
    %147 = tpu.memref_slice %arg3[%c0_i32_91, %c0_i32_92] : memref<64x128xf32, #tpu.memory_space<any>> -> memref<1x128xf32, #tpu.memory_space<any>>
    %c0_i32_93 = arith.constant 0 : i32
    %148 = tpu.memref_slice %arg6[%c4_i32_84, %c0_i32_93] : memref<8x128xf32, #tpu.memory_space<vmem>> -> memref<1x128xf32, #tpu.memory_space<vmem>>
    %149 = tpu.memref_slice %arg7[%146] : memref<8x!tpu.dma_semaphore, #tpu.memory_space<semaphore_mem>> -> memref<1x!tpu.dma_semaphore, #tpu.memory_space<semaphore_mem>>
    %150 = tpu.memref_squeeze %149 : memref<1x!tpu.dma_semaphore, #tpu.memory_space<semaphore_mem>> -> memref<!tpu.dma_semaphore, #tpu.memory_space<semaphore_mem>>
    tpu.wait_dma2 semaphore(%150 : memref<!tpu.dma_semaphore, #tpu.memory_space<semaphore_mem>>) src(%147 : memref<1x128xf32, #tpu.memory_space<any>>) dst(%148 : memref<1x128xf32, #tpu.memory_space<vmem>>)
    %c8_i32_94 = arith.constant 8 : i32
    %151 = arith.addi %c4_i32_84, %c8_i32_94 : i32
    %c8_i32_95 = arith.constant 8 : i32
    %152 = arith.cmpi slt, %151, %c8_i32_95 : i32
    %153 = arith.extui %152 : i1 to i32
    %c0_i32_96 = arith.constant 0 : i32
    %154 = arith.cmpi ne, %153, %c0_i32_96 : i32
    scf.if %154 {
      %c8_i32_142 = arith.constant 8 : i32
      %216 = arith.addi %c4_i32_84, %c8_i32_142 : i32
      %217 = arith.addi %0, %216 : i32
      %218 = arith.index_cast %arg0 : i32 to index
      %219 = arith.index_cast %217 : i32 to index
      %220 = memref.load %arg2[%218, %219] : memref<2x8xi32, #tpu.memory_space<smem>>
      %c0_i32_143 = arith.constant 0 : i32
      %221 = tpu.memref_slice %arg3[%220, %c0_i32_143] : memref<64x128xf32, #tpu.memory_space<any>> -> memref<1x128xf32, #tpu.memory_space<any>>
      %c0_i32_144 = arith.constant 0 : i32
      %222 = tpu.memref_slice %arg6[%216, %c0_i32_144] : memref<8x128xf32, #tpu.memory_space<vmem>> -> memref<1x128xf32, #tpu.memory_space<vmem>>
      %223 = tpu.memref_slice %arg7[%146] : memref<8x!tpu.dma_semaphore, #tpu.memory_space<semaphore_mem>> -> memref<1x!tpu.dma_semaphore, #tpu.memory_space<semaphore_mem>>
      %224 = tpu.memref_squeeze %223 : memref<1x!tpu.dma_semaphore, #tpu.memory_space<semaphore_mem>> -> memref<!tpu.dma_semaphore, #tpu.memory_space<semaphore_mem>>
      tpu.enqueue_dma source(%221 : memref<1x128xf32, #tpu.memory_space<any>>) target(%222 : memref<1x128xf32, #tpu.memory_space<vmem>>) target_semaphore(%224 : memref<!tpu.dma_semaphore, #tpu.memory_space<semaphore_mem>>)
    } else {
    }
    %c5_i32_97 = arith.constant 5 : i32
    %c8_i32_98 = arith.constant 8 : i32
    %c0_i32_99 = arith.constant 0 : i32
    %155 = arith.cmpi eq, %c8_i32_98, %c0_i32_99 : i32
    %c1_i32_100 = arith.constant 1 : i32
    %156 = arith.select %155, %c1_i32_100, %c8_i32_98 : i32
    %157 = arith.remsi %c5_i32_97, %156 : i32
    %c0_i32_101 = arith.constant 0 : i32
    %158 = arith.cmpi ne, %157, %c0_i32_101 : i32
    %c0_i32_102 = arith.constant 0 : i32
    %159 = arith.cmpi slt, %157, %c0_i32_102 : i32
    %c0_i32_103 = arith.constant 0 : i32
    %160 = arith.cmpi slt, %156, %c0_i32_103 : i32
    %161 = arith.xori %159, %160 : i1
    %162 = arith.andi %161, %158 : i1
    %163 = arith.addi %157, %156 : i32
    %164 = arith.select %162, %163, %157 : i32
    %c0_i32_104 = arith.constant 0 : i32
    %c0_i32_105 = arith.constant 0 : i32
    %165 = tpu.memref_slice %arg3[%c0_i32_104, %c0_i32_105] : memref<64x128xf32, #tpu.memory_space<any>> -> memref<1x128xf32, #tpu.memory_space<any>>
    %c0_i32_106 = arith.constant 0 : i32
    %166 = tpu.memref_slice %arg6[%c5_i32_97, %c0_i32_106] : memref<8x128xf32, #tpu.memory_space<vmem>> -> memref<1x128xf32, #tpu.memory_space<vmem>>
    %167 = tpu.memref_slice %arg7[%164] : memref<8x!tpu.dma_semaphore, #tpu.memory_space<semaphore_mem>> -> memref<1x!tpu.dma_semaphore, #tpu.memory_space<semaphore_mem>>
    %168 = tpu.memref_squeeze %167 : memref<1x!tpu.dma_semaphore, #tpu.memory_space<semaphore_mem>> -> memref<!tpu.dma_semaphore, #tpu.memory_space<semaphore_mem>>
    tpu.wait_dma2 semaphore(%168 : memref<!tpu.dma_semaphore, #tpu.memory_space<semaphore_mem>>) src(%165 : memref<1x128xf32, #tpu.memory_space<any>>) dst(%166 : memref<1x128xf32, #tpu.memory_space<vmem>>)
    %c8_i32_107 = arith.constant 8 : i32
    %169 = arith.addi %c5_i32_97, %c8_i32_107 : i32
    %c8_i32_108 = arith.constant 8 : i32
    %170 = arith.cmpi slt, %169, %c8_i32_108 : i32
    %171 = arith.extui %170 : i1 to i32
    %c0_i32_109 = arith.constant 0 : i32
    %172 = arith.cmpi ne, %171, %c0_i32_109 : i32
    scf.if %172 {
      %c8_i32_142 = arith.constant 8 : i32
      %216 = arith.addi %c5_i32_97, %c8_i32_142 : i32
      %217 = arith.addi %0, %216 : i32
      %218 = arith.index_cast %arg0 : i32 to index
      %219 = arith.index_cast %217 : i32 to index
      %220 = memref.load %arg2[%218, %219] : memref<2x8xi32, #tpu.memory_space<smem>>
      %c0_i32_143 = arith.constant 0 : i32
      %221 = tpu.memref_slice %arg3[%220, %c0_i32_143] : memref<64x128xf32, #tpu.memory_space<any>> -> memref<1x128xf32, #tpu.memory_space<any>>
      %c0_i32_144 = arith.constant 0 : i32
      %222 = tpu.memref_slice %arg6[%216, %c0_i32_144] : memref<8x128xf32, #tpu.memory_space<vmem>> -> memref<1x128xf32, #tpu.memory_space<vmem>>
      %223 = tpu.memref_slice %arg7[%164] : memref<8x!tpu.dma_semaphore, #tpu.memory_space<semaphore_mem>> -> memref<1x!tpu.dma_semaphore, #tpu.memory_space<semaphore_mem>>
      %224 = tpu.memref_squeeze %223 : memref<1x!tpu.dma_semaphore, #tpu.memory_space<semaphore_mem>> -> memref<!tpu.dma_semaphore, #tpu.memory_space<semaphore_mem>>
      tpu.enqueue_dma source(%221 : memref<1x128xf32, #tpu.memory_space<any>>) target(%222 : memref<1x128xf32, #tpu.memory_space<vmem>>) target_semaphore(%224 : memref<!tpu.dma_semaphore, #tpu.memory_space<semaphore_mem>>)
    } else {
    }
    %c6_i32_110 = arith.constant 6 : i32
    %c8_i32_111 = arith.constant 8 : i32
    %c0_i32_112 = arith.constant 0 : i32
    %173 = arith.cmpi eq, %c8_i32_111, %c0_i32_112 : i32
    %c1_i32_113 = arith.constant 1 : i32
    %174 = arith.select %173, %c1_i32_113, %c8_i32_111 : i32
    %175 = arith.remsi %c6_i32_110, %174 : i32
    %c0_i32_114 = arith.constant 0 : i32
    %176 = arith.cmpi ne, %175, %c0_i32_114 : i32
    %c0_i32_115 = arith.constant 0 : i32
    %177 = arith.cmpi slt, %175, %c0_i32_115 : i32
    %c0_i32_116 = arith.constant 0 : i32
    %178 = arith.cmpi slt, %174, %c0_i32_116 : i32
    %179 = arith.xori %177, %178 : i1
    %180 = arith.andi %179, %176 : i1
    %181 = arith.addi %175, %174 : i32
    %182 = arith.select %180, %181, %175 : i32
    %c0_i32_117 = arith.constant 0 : i32
    %c0_i32_118 = arith.constant 0 : i32
    %183 = tpu.memref_slice %arg3[%c0_i32_117, %c0_i32_118] : memref<64x128xf32, #tpu.memory_space<any>> -> memref<1x128xf32, #tpu.memory_space<any>>
    %c0_i32_119 = arith.constant 0 : i32
    %184 = tpu.memref_slice %arg6[%c6_i32_110, %c0_i32_119] : memref<8x128xf32, #tpu.memory_space<vmem>> -> memref<1x128xf32, #tpu.memory_space<vmem>>
    %185 = tpu.memref_slice %arg7[%182] : memref<8x!tpu.dma_semaphore, #tpu.memory_space<semaphore_mem>> -> memref<1x!tpu.dma_semaphore, #tpu.memory_space<semaphore_mem>>
    %186 = tpu.memref_squeeze %185 : memref<1x!tpu.dma_semaphore, #tpu.memory_space<semaphore_mem>> -> memref<!tpu.dma_semaphore, #tpu.memory_space<semaphore_mem>>
    tpu.wait_dma2 semaphore(%186 : memref<!tpu.dma_semaphore, #tpu.memory_space<semaphore_mem>>) src(%183 : memref<1x128xf32, #tpu.memory_space<any>>) dst(%184 : memref<1x128xf32, #tpu.memory_space<vmem>>)
    %c8_i32_120 = arith.constant 8 : i32
    %187 = arith.addi %c6_i32_110, %c8_i32_120 : i32
    %c8_i32_121 = arith.constant 8 : i32
    %188 = arith.cmpi slt, %187, %c8_i32_121 : i32
    %189 = arith.extui %188 : i1 to i32
    %c0_i32_122 = arith.constant 0 : i32
    %190 = arith.cmpi ne, %189, %c0_i32_122 : i32
    scf.if %190 {
      %c8_i32_142 = arith.constant 8 : i32
      %216 = arith.addi %c6_i32_110, %c8_i32_142 : i32
      %217 = arith.addi %0, %216 : i32
      %218 = arith.index_cast %arg0 : i32 to index
      %219 = arith.index_cast %217 : i32 to index
      %220 = memref.load %arg2[%218, %219] : memref<2x8xi32, #tpu.memory_space<smem>>
      %c0_i32_143 = arith.constant 0 : i32
      %221 = tpu.memref_slice %arg3[%220, %c0_i32_143] : memref<64x128xf32, #tpu.memory_space<any>> -> memref<1x128xf32, #tpu.memory_space<any>>
      %c0_i32_144 = arith.constant 0 : i32
      %222 = tpu.memref_slice %arg6[%216, %c0_i32_144] : memref<8x128xf32, #tpu.memory_space<vmem>> -> memref<1x128xf32, #tpu.memory_space<vmem>>
      %223 = tpu.memref_slice %arg7[%182] : memref<8x!tpu.dma_semaphore, #tpu.memory_space<semaphore_mem>> -> memref<1x!tpu.dma_semaphore, #tpu.memory_space<semaphore_mem>>
      %224 = tpu.memref_squeeze %223 : memref<1x!tpu.dma_semaphore, #tpu.memory_space<semaphore_mem>> -> memref<!tpu.dma_semaphore, #tpu.memory_space<semaphore_mem>>
      tpu.enqueue_dma source(%221 : memref<1x128xf32, #tpu.memory_space<any>>) target(%222 : memref<1x128xf32, #tpu.memory_space<vmem>>) target_semaphore(%224 : memref<!tpu.dma_semaphore, #tpu.memory_space<semaphore_mem>>)
    } else {
    }
    %c7_i32_123 = arith.constant 7 : i32
    %c8_i32_124 = arith.constant 8 : i32
    %c0_i32_125 = arith.constant 0 : i32
    %191 = arith.cmpi eq, %c8_i32_124, %c0_i32_125 : i32
    %c1_i32_126 = arith.constant 1 : i32
    %192 = arith.select %191, %c1_i32_126, %c8_i32_124 : i32
    %193 = arith.remsi %c7_i32_123, %192 : i32
    %c0_i32_127 = arith.constant 0 : i32
    %194 = arith.cmpi ne, %193, %c0_i32_127 : i32
    %c0_i32_128 = arith.constant 0 : i32
    %195 = arith.cmpi slt, %193, %c0_i32_128 : i32
    %c0_i32_129 = arith.constant 0 : i32
    %196 = arith.cmpi slt, %192, %c0_i32_129 : i32
    %197 = arith.xori %195, %196 : i1
    %198 = arith.andi %197, %194 : i1
    %199 = arith.addi %193, %192 : i32
    %200 = arith.select %198, %199, %193 : i32
    %c0_i32_130 = arith.constant 0 : i32
    %c0_i32_131 = arith.constant 0 : i32
    %201 = tpu.memref_slice %arg3[%c0_i32_130, %c0_i32_131] : memref<64x128xf32, #tpu.memory_space<any>> -> memref<1x128xf32, #tpu.memory_space<any>>
    %c0_i32_132 = arith.constant 0 : i32
    %202 = tpu.memref_slice %arg6[%c7_i32_123, %c0_i32_132] : memref<8x128xf32, #tpu.memory_space<vmem>> -> memref<1x128xf32, #tpu.memory_space<vmem>>
    %203 = tpu.memref_slice %arg7[%200] : memref<8x!tpu.dma_semaphore, #tpu.memory_space<semaphore_mem>> -> memref<1x!tpu.dma_semaphore, #tpu.memory_space<semaphore_mem>>
    %204 = tpu.memref_squeeze %203 : memref<1x!tpu.dma_semaphore, #tpu.memory_space<semaphore_mem>> -> memref<!tpu.dma_semaphore, #tpu.memory_space<semaphore_mem>>
    tpu.wait_dma2 semaphore(%204 : memref<!tpu.dma_semaphore, #tpu.memory_space<semaphore_mem>>) src(%201 : memref<1x128xf32, #tpu.memory_space<any>>) dst(%202 : memref<1x128xf32, #tpu.memory_space<vmem>>)
    %c8_i32_133 = arith.constant 8 : i32
    %205 = arith.addi %c7_i32_123, %c8_i32_133 : i32
    %c8_i32_134 = arith.constant 8 : i32
    %206 = arith.cmpi slt, %205, %c8_i32_134 : i32
    %207 = arith.extui %206 : i1 to i32
    %c0_i32_135 = arith.constant 0 : i32
    %208 = arith.cmpi ne, %207, %c0_i32_135 : i32
    scf.if %208 {
      %c8_i32_142 = arith.constant 8 : i32
      %216 = arith.addi %c7_i32_123, %c8_i32_142 : i32
      %217 = arith.addi %0, %216 : i32
      %218 = arith.index_cast %arg0 : i32 to index
      %219 = arith.index_cast %217 : i32 to index
      %220 = memref.load %arg2[%218, %219] : memref<2x8xi32, #tpu.memory_space<smem>>
      %c0_i32_143 = arith.constant 0 : i32
      %221 = tpu.memref_slice %arg3[%220, %c0_i32_143] : memref<64x128xf32, #tpu.memory_space<any>> -> memref<1x128xf32, #tpu.memory_space<any>>
      %c0_i32_144 = arith.constant 0 : i32
      %222 = tpu.memref_slice %arg6[%216, %c0_i32_144] : memref<8x128xf32, #tpu.memory_space<vmem>> -> memref<1x128xf32, #tpu.memory_space<vmem>>
      %223 = tpu.memref_slice %arg7[%200] : memref<8x!tpu.dma_semaphore, #tpu.memory_space<semaphore_mem>> -> memref<1x!tpu.dma_semaphore, #tpu.memory_space<semaphore_mem>>
      %224 = tpu.memref_squeeze %223 : memref<1x!tpu.dma_semaphore, #tpu.memory_space<semaphore_mem>> -> memref<!tpu.dma_semaphore, #tpu.memory_space<semaphore_mem>>
      tpu.enqueue_dma source(%221 : memref<1x128xf32, #tpu.memory_space<any>>) target(%222 : memref<1x128xf32, #tpu.memory_space<vmem>>) target_semaphore(%224 : memref<!tpu.dma_semaphore, #tpu.memory_space<semaphore_mem>>)
    } else {
    }
    %c8_i32_136 = arith.constant 8 : i32
    %c0 = arith.constant 0 : index
    %c0_137 = arith.constant 0 : index
    %209 = vector.load %arg6[%c0, %c0_137] : memref<8x128xf32, #tpu.memory_space<vmem>>, vector<8x128xf32>
    %210 = tpu.assume_multiple %0, 8 : i32
    %211 = arith.index_cast %210 : i32 to index
    %c0_138 = arith.constant 0 : index
    %212 = vector.load %arg4[%211, %c0_138] : memref<16x128xf32, #tpu.memory_space<vmem>>, vector<8x128xf32>
    %213 = arith.addf %209, %212 : vector<8x128xf32>
    %214 = vector.shape_cast %213 : vector<8x128xf32> to vector<1x8x128xf32>
    %c0_139 = arith.constant 0 : index
    %c0_140 = arith.constant 0 : index
    %c0_141 = arith.constant 0 : index
    %215 = vector.load %arg5[%c0_139, %c0_140, %c0_141] : memref<1x8x128xf32, #tpu.memory_space<vmem>>, vector<1x8x128xf32>
    tpu.vector_store %arg5[%c0_139, %c0_140, %c0_141], %214 {strides = array<i32>} : memref<1x8x128xf32, #tpu.memory_space<vmem>>, vector<1x8x128xf32>,
    return
  }
  func.func @transform_1(%arg0: i32, %arg1: i32, %arg2: memref<2x8xi32, #tpu.memory_space<smem>>) -> (i32, i32) {
    %c0_i32 = arith.constant 0 : i32
    %c0_i32_0 = arith.constant 0 : i32
    %c0_i32_1 = arith.constant 0 : i32
    return %c0_i32, %c0_i32_0 : i32, i32
  }
  func.func @transform_2(%arg0: i32, %arg1: i32, %arg2: memref<2x8xi32, #tpu.memory_space<smem>>) -> (i32, i32, i32) {
    %c0_i32 = arith.constant 0 : i32
    %c0_i32_0 = arith.constant 0 : i32
    return %arg0, %arg1, %c0_i32 : i32, i32, i32
  }
}

</mosaic_0001>

<llo_original>
// kernel: tpu_custom_call.1
$region0: #{tpu_custom_call.1}
  #allocation0 [shape = 'u32[]', space=smem, size = 0x4, offset = 0x4, fixed_abs, tag = 'smem constant byte address 0x4 - core index']
  #allocation1 [shape = 'u32[72,128]{1,0:T(1,128)}', space=vmem, size = 0x9000, scoped, tag = 'internal scratch']
  #allocation2 [shape = 'f32[8,128]{1,0:T(8,128)}', space=vmem, size = 0x1000, scoped, tag = 'scratch operand']
  #allocation3 [shape = 's32[8]{0}', space=sflag, size = 0x20, scoped, tag = 'scratch operand']
  #allocation4 [shape = 's32[1]{0}', space=sflag, size = 0x4, scoped, tag = 'scoped memory for tpu_custom_call.1']
  #allocation5 [shape = 'u8[1024]{0}', space=smem, size = 0x400, scoped, tag = 'prefetched SMEM operand 0']
  #allocation10 [shape = 's32[]', space=sflag, size = 0x4, offset = 0, fixed_abs, tag = 'sflag constant byte address 0x0 - dummy sync flag']
  #allocation11 [shape = 's32[]', space=sflag, size = 0x4, offset = 0, fixed_abs, tag = 'sflag constant byte address 0x0 - dummy sync flag']
  #allocation12 [shape = 'u32[]', space=smem, size = 0x4, offset = 0x44, fixed_abs, tag = 'smem constant byte address 0x44 - assertion arg 0']
  #allocation13 [shape = 'u32[]', space=smem, size = 0x4, offset = 0x48, fixed_abs, tag = 'smem constant byte address 0x48 - assertion arg 1']
  #allocation14 [shape = 's32[]', space=sflag, size = 0x4, offset = 0, fixed_abs, tag = 'sflag constant byte address 0x0 - dummy sync flag']
  #allocation15 [shape = 's32[]', space=sflag, size = 0x4, offset = 0, fixed_abs, tag = 'sflag constant byte address 0x0 - dummy sync flag']
  #allocation16 [shape = 's32[]', space=sflag, size = 0x4, offset = 0, fixed_abs, tag = 'sflag constant byte address 0x0 - dummy sync flag']
  #allocation17 [shape = 's32[]', space=sflag, size = 0x4, offset = 0, fixed_abs, tag = 'sflag constant byte address 0x0 - dummy sync flag']
  #allocation18 [shape = 's32[]', space=sflag, size = 0x4, offset = 0, fixed_abs, tag = 'sflag constant byte address 0x0 - dummy sync flag']
  #allocation19 [shape = 's32[]', space=sflag, size = 0x4, offset = 0, fixed_abs, tag = 'sflag constant byte address 0x0 - dummy sync flag']
  #allocation20 [shape = 's32[]', space=sflag, size = 0x4, offset = 0, fixed_abs, tag = 'sflag constant byte address 0x0 - dummy sync flag']
  #allocation21 [shape = 's32[]', space=sflag, size = 0x4, offset = 0, fixed_abs, tag = 'sflag constant byte address 0x0 - dummy sync flag']
  #allocation22 [shape = 's32[]', space=sflag, size = 0x4, offset = 0, fixed_abs, tag = 'sflag constant byte address 0x0 - dummy sync flag']
  #allocation23 [shape = 's32[]', space=sflag, size = 0x4, offset = 0, fixed_abs, tag = 'sflag constant byte address 0x0 - dummy sync flag']
  #allocation24 [shape = 's32[]', space=sflag, size = 0x4, offset = 0, fixed_abs, tag = 'sflag constant byte address 0x0 - dummy sync flag']
  #allocation25 [shape = 's32[]', space=sflag, size = 0x4, offset = 0, fixed_abs, tag = 'sflag constant byte address 0x0 - dummy sync flag']
  #allocation26 [shape = 's32[]', space=sflag, size = 0x4, offset = 0, fixed_abs, tag = 'sflag constant byte address 0x0 - dummy sync flag']
  #allocation27 [shape = 's32[]', space=sflag, size = 0x4, offset = 0, fixed_abs, tag = 'sflag constant byte address 0x0 - dummy sync flag']
  %s0 = inlined_call_operand.hbm [shape: s32[2,8], index: 0, kind: input, shape index: {}]
  %s1 = inlined_call_operand.hbm [shape: f32[64,128], index: 1, kind: input, shape index: {}]
  %s2 = inlined_call_operand.hbm [shape: f32[16,128], index: 2, kind: input, shape index: {}]
  %s3 = inlined_call_operand.hbm [shape: f32[2,8,128], index: 3, kind: output, shape index: {}]
  %s4 = sld [smem:[#allocation0]]
  $region73: #{tpu_custom_call.1} parent=0
    _
  %s6 = ssub.s32 1, %s4
  %s7 = scalar_select 0, %s6, %s4
  %s9 = sshll.u32 %s0, 4
  %s10 = int_to_ptr.hbm [resolvable:$true] %s9
  %12 = dma.hbm_to_smem %s10, 32, [#allocation5], [#allocation4]
  %14 = dma.done [#allocation4], 32
  %15 = sfence
  $region1: #{tpu_custom_call.1} parent=0
    #allocation6 [shape = 'u8[8192]{0}', space=vmem, size = 0x2000, scoped, tag = 'input window, operand 2, single buffered']
    #allocation7 [shape = 's32[2]{0}', space=sflag, size = 0x8, scoped, tag = 'scoped memory for tpu_custom_call.1']
    #allocation8 [shape = 's32[2]{0}', space=sflag, size = 0x8, scoped, tag = 'scoped memory for tpu_custom_call.1']
    #allocation9 [shape = 'u8[8192]{0}', space=vmem, size = 0x2000, scoped, tag = 'output window, operand 0']
    %16 = vsyncpa [#allocation7], 0
    %17 = vsyncpa [#allocation8], 0
    %s18 = scalar_lea.sflag [#allocation8], 1
    %19 = vsyncpa %s18, 0
    loop: start=0, step=1, limit=4
    $region2: #{tpu_custom_call.1} parent=1 // loop_pre_header
      _
    $region3: #{tpu_custom_call.1} parent=1 // loop_header
      %s21 = sphi 0, %s25
      %p22 = scmp.ge.s32.totalorder %s21, 4
      %s28 = sphi 0, %s40
      %s29 = sphi 0, %s36
      %s30 = sphi 0, %s28
      %s31 = sphi 0, %s29
      %s32 = sphi 0, %s30
      %s33 = sphi 0, %s31
      %s41 = sphi 0, %s41
      %s43 = sphi 0, %s41
      %s44 = sphi 0, %s43
      %s58 = sphi 0, %s44
      %s66 = sphi 0, %s68
      %s69 = sphi 0, %s66
      %s70 = sphi 0, %s69
      %s86 = sphi 0, %s70
    $region4: #{tpu_custom_call.1} parent=1 // loop_header_branch
      %24 = sbr.rel (%p22) target = $region8
    $region5: #{tpu_custom_call.1} parent=1 // loop_body
      %s26 = ssub.s32 %s21, 1
      %s27 = ssub.s32 %s21, 2
      %s34 = sadd.s32 1, %s29
      %p35 = scmp.ge.s32.totalorder %s34, 1
      %s36 = scalar_select %p35, 0, %s34
      %s37 = sadd.s32 1, %s28
      %s38 = scalar_select %p35, %s37, %s28
      %p39 = scmp.ge.s32.totalorder %s38, 2
      %s40 = scalar_select %p39, 0, %s38
      %s42 = sadd.s32 %s41, 1
      %p45 = scmp.eq.s32.totalorder %s21, 1
      %p46 = scmp.ne.s32.totalorder %s41, %s43
      %p47 = scmp.eq.s32.totalorder %s21, 0
      %p48 = por %p46, %p47
      %p49 = scmp.ne.s32.totalorder %s41, %s43
      %p50 = scmp.eq.s32.totalorder %s26, 1
      %p51 = por %p49, %p50
      %p52 = scmp.ne.s32.totalorder %s43, %s44
      %p53 = scmp.eq.s32.totalorder %s26, 0
      %p54 = por %p52, %p53
      %p55 = scmp.ne.s32.totalorder %s43, %s44
      %p56 = scmp.eq.s32.totalorder %s27, 1
      %p57 = por %p55, %p56
      %p59 = scmp.ne.s32.totalorder %s44, %s58
      %p60 = scmp.eq.s32.totalorder %s27, 0
      %p61 = por %p59, %p60
      %s62 = ssub.s32 %s28, %s40
      %s63 = ssub.s32 %s29, %s36
      %s64 = sor.u32 %s62, %s63
      %p65 = scmp.eq.s32.totalorder %s64, 0
      %s67 = sadd.s32 %s66, 1
      %s68 = scalar_select %p65, %s66, %s67
      %p71 = pneg %p65
      %p72 = scmp.eq.s32.totalorder %s21, 1
      %p73 = por %p71, %p72
      %p74 = scmp.ne.s32.totalorder %s66, %s69
      %p75 = scmp.eq.s32.totalorder %s21, 0
      %p76 = por %p74, %p75
      %p77 = scmp.ne.s32.totalorder %s66, %s69
      %p78 = scmp.eq.s32.totalorder %s26, 1
      %p79 = por %p77, %p78
      %p80 = scmp.ne.s32.totalorder %s69, %s70
      %p81 = scmp.eq.s32.totalorder %s26, 0
      %p82 = por %p80, %p81
      %p83 = scmp.ne.s32.totalorder %s69, %s70
      %p84 = scmp.eq.s32.totalorder %s27, 1
      %p85 = por %p83, %p84
      %p87 = scmp.ne.s32.totalorder %s70, %s86
      %p88 = scmp.eq.s32.totalorder %s27, 0
      %p89 = por %p87, %p88
      %p90 = scmp.le.s32.totalorder 1, %s21
      %p91 = scmp.lt.s32.totalorder %s21, 3
      %p92 = pnand %p90, %p91
      %p93 = pneg %p92
      // Predicated region
      $region9: #{tpu_custom_call.1} parent=5 // pred_check
        _
      $region10: #{tpu_custom_call.1} parent=5 // pred_check_branch
        %95 = sbr.rel (%p92) target = $region12
      $region11: #{tpu_custom_call.1} parent=5 // pred_region
        %s96 = ssub.s32 %s21, 1
        // Predicated region
        $region13: #{tpu_custom_call.1} parent=11 // pred_check
          %p97 = pneg %p54
        $region14: #{tpu_custom_call.1} parent=11 // pred_check_branch
          %99 = sbr.rel (%p97) target = $region16
        $region15: #{tpu_custom_call.1} parent=11 // pred_region
          %101 = vsyncadd [#allocation7], 0
          %s102 = sshll.u32 %s2, 4
          %s103 = int_to_ptr.hbm [resolvable:$true] %s102
          %s104 = sshll.u32 [#allocation6], 4
          %s105 = int_to_ptr.vmem [resolvable:$true] %s104
          %110 = dma.hbm_to_vmem [thread:$0]  %s103, 256, %s105, [#allocation7], 128, 128, 8
        $region16: #{tpu_custom_call.1} parent=11 // pred_fallthru
          _
      $region12: #{tpu_custom_call.1} parent=5 // pred_fallthru
        _
      %p111 = scmp.lt.s32.totalorder %s21, 2
      // Predicated region
      $region17: #{tpu_custom_call.1} parent=5 // pred_check
        %p112 = pneg %p111
      $region18: #{tpu_custom_call.1} parent=5 // pred_check_branch
        %114 = sbr.rel (%p112) target = $region20
      $region19: #{tpu_custom_call.1} parent=5 // pred_region
        _
      $region20: #{tpu_custom_call.1} parent=5 // pred_fallthru
        _
      %p115 = scmp.le.s32.totalorder 1, %s21
      %p116 = scmp.lt.s32.totalorder %s21, 3
      %p117 = pnand %p115, %p116
      %p118 = pneg %p117
      // Predicated region
      $region21: #{tpu_custom_call.1} parent=5 // pred_check
        _
      $region22: #{tpu_custom_call.1} parent=5 // pred_check_branch
        %120 = sbr.rel (%p117) target = $region24
      $region23: #{tpu_custom_call.1} parent=5 // pred_region
        %s121 = ssub.s32 %s21, 1
        // Predicated region
        $region25: #{tpu_custom_call.1} parent=23 // pred_check
          %p122 = pneg %p54
        $region26: #{tpu_custom_call.1} parent=23 // pred_check_branch
          %124 = sbr.rel (%p122) target = $region28
        $region27: #{tpu_custom_call.1} parent=23 // pred_region
          %126 = dma.done [#allocation7], 256
        $region28: #{tpu_custom_call.1} parent=23 // pred_fallthru
          _
        %p127 = pneg %p54
        %p128 = pneg %p51
        %p129 = pneg %p82
        %p130 = pneg %p79
        %s131 = sand.u32 %s69, 1
        %s132 = scalar_lea.sflag [#allocation8], %s131
        %s133 = sand.u32 %s69, 1
        %s134 = smul.addr %s133, 8
        %s135 = scalar_lea.vmem [#allocation9], %s134
        %s136 = smul.u32 %s31, 8
        %s137 = sshra.s32 %s136, 7
        %s138 = sand.u32 %s136, 127
        %s139 = sadd.s32 %s137, %s30
        %s140 = smul.u32 %s139, 128
        %s141 = sshra.s32 %s136, 7
        %s142 = sand.u32 %s136, 127
        %s143 = sadd.s32 %s140, %s142
        %s144 = sld [smem:[#allocation5 + %s143]]
        %s145 = scalar_lea.hbm %s1, %s144
        // Predicated region
        $region29: #{tpu_custom_call.1} parent=23 // pred_check
          _
        $region30: #{tpu_custom_call.1} parent=23 // pred_check_branch
          %147 = sbr.rel target = $region32
        $region31: #{tpu_custom_call.1} parent=23 // pred_region
          %148 = sst [smem:[#allocation12]] [#allocation11]
          %149 = sst [smem:[#allocation13]] [#allocation10]
        $region32: #{tpu_custom_call.1} parent=23 // pred_fallthru
          _
        %151 = shalt.err (0)
        %s153 = sshll.u32 %s145, 4
        %s154 = int_to_ptr.hbm [resolvable:$true] %s153
        %s155 = sshll.u32 [#allocation2], 4
        %s156 = int_to_ptr.vmem [resolvable:$true] %s155
        %158 = dma.hbm_to_vmem [thread:$0]  %s154, 16, %s156, [#allocation3]
        %s159 = sadd.s32 %s136, 1
        %s160 = sshra.s32 %s159, 7
        %s161 = sand.u32 %s159, 127
        %s162 = sadd.s32 %s160, %s30
        %s163 = smul.u32 %s162, 128
        %s164 = sshra.s32 %s159, 7
        %s165 = sand.u32 %s159, 127
        %s166 = sadd.s32 %s163, %s165
        %s167 = sld [smem:[#allocation5 + %s166]]
        %s168 = scalar_lea.hbm %s1, %s167
        %s169 = scalar_lea.vmem [#allocation2], 1
        %s170 = scalar_lea.sflag [#allocation3], 1
        // Predicated region
        $region33: #{tpu_custom_call.1} parent=23 // pred_check
          _
        $region34: #{tpu_custom_call.1} parent=23 // pred_check_branch
          %172 = sbr.rel target = $region36
        $region35: #{tpu_custom_call.1} parent=23 // pred_region
          %173 = sst [smem:[#allocation12]] [#allocation15]
          %174 = sst [smem:[#allocation13]] [#allocation14]
        $region36: #{tpu_custom_call.1} parent=23 // pred_fallthru
          _
        %176 = shalt.err (0)
        %s178 = sshll.u32 %s168, 4
        %s179 = int_to_ptr.hbm [resolvable:$true] %s178
        %s180 = sshll.u32 %s169, 4
        %s181 = int_to_ptr.vmem [resolvable:$true] %s180
        %183 = dma.hbm_to_vmem [thread:$0]  %s179, 16, %s181, %s170
        %s184 = sadd.s32 %s136, 2
        %s185 = sshra.s32 %s184, 7
        %s186 = sand.u32 %s184, 127
        %s187 = sadd.s32 %s185, %s30
        %s188 = smul.u32 %s187, 128
        %s189 = sshra.s32 %s184, 7
        %s190 = sand.u32 %s184, 127
        %s191 = sadd.s32 %s188, %s190
        %s192 = sld [smem:[#allocation5 + %s191]]
        %s193 = scalar_lea.hbm %s1, %s192
        %s194 = scalar_lea.vmem [#allocation2], 2
        %s195 = scalar_lea.sflag [#allocation3], 2
        // Predicated region
        $region37: #{tpu_custom_call.1} parent=23 // pred_check
          _
        $region38: #{tpu_custom_call.1} parent=23 // pred_check_branch
          %197 = sbr.rel target = $region40
        $region39: #{tpu_custom_call.1} parent=23 // pred_region
          %198 = sst [smem:[#allocation12]] [#allocation17]
          %199 = sst [smem:[#allocation13]] [#allocation16]
        $region40: #{tpu_custom_call.1} parent=23 // pred_fallthru
          _
        %201 = shalt.err (0)
        %s203 = sshll.u32 %s193, 4
        %s204 = int_to_ptr.hbm [resolvable:$true] %s203
        %s205 = sshll.u32 %s194, 4
        %s206 = int_to_ptr.vmem [resolvable:$true] %s205
        %208 = dma.hbm_to_vmem [thread:$0]  %s204, 16, %s206, %s195
        %s209 = sadd.s32 %s136, 3
        %s210 = sshra.s32 %s209, 7
        %s211 = sand.u32 %s209, 127
        %s212 = sadd.s32 %s210, %s30
        %s213 = smul.u32 %s212, 128
        %s214 = sshra.s32 %s209, 7
        %s215 = sand.u32 %s209, 127
        %s216 = sadd.s32 %s213, %s215
        %s217 = sld [smem:[#allocation5 + %s216]]
        %s218 = scalar_lea.hbm %s1, %s217
        %s219 = scalar_lea.vmem [#allocation2], 3
        %s220 = scalar_lea.sflag [#allocation3], 3
        // Predicated region
        $region41: #{tpu_custom_call.1} parent=23 // pred_check
          _
        $region42: #{tpu_custom_call.1} parent=23 // pred_check_branch
          %222 = sbr.rel target = $region44
        $region43: #{tpu_custom_call.1} parent=23 // pred_region
          %223 = sst [smem:[#allocation12]] [#allocation19]
          %224 = sst [smem:[#allocation13]] [#allocation18]
        $region44: #{tpu_custom_call.1} parent=23 // pred_fallthru
          _
        %226 = shalt.err (0)
        %s228 = sshll.u32 %s218, 4
        %s229 = int_to_ptr.hbm [resolvable:$true] %s228
        %s230 = sshll.u32 %s219, 4
        %s231 = int_to_ptr.vmem [resolvable:$true] %s230
        %233 = dma.hbm_to_vmem [thread:$0]  %s229, 16, %s231, %s220
        %s234 = sadd.s32 %s136, 4
        %s235 = sshra.s32 %s234, 7
        %s236 = sand.u32 %s234, 127
        %s237 = sadd.s32 %s235, %s30
        %s238 = smul.u32 %s237, 128
        %s239 = sshra.s32 %s234, 7
        %s240 = sand.u32 %s234, 127
        %s241 = sadd.s32 %s238, %s240
        %s242 = sld [smem:[#allocation5 + %s241]]
        %s243 = scalar_lea.hbm %s1, %s242
        %s244 = scalar_lea.vmem [#allocation2], 4
        %s245 = scalar_lea.sflag [#allocation3], 4
        // Predicated region
        $region45: #{tpu_custom_call.1} parent=23 // pred_check
          _
        $region46: #{tpu_custom_call.1} parent=23 // pred_check_branch
          %247 = sbr.rel target = $region48
        $region47: #{tpu_custom_call.1} parent=23 // pred_region
          %248 = sst [smem:[#allocation12]] [#allocation21]
          %249 = sst [smem:[#allocation13]] [#allocation20]
        $region48: #{tpu_custom_call.1} parent=23 // pred_fallthru
          _
        %251 = shalt.err (0)
        %s253 = sshll.u32 %s243, 4
        %s254 = int_to_ptr.hbm [resolvable:$true] %s253
        %s255 = sshll.u32 %s244, 4
        %s256 = int_to_ptr.vmem [resolvable:$true] %s255
        %258 = dma.hbm_to_vmem [thread:$0]  %s254, 16, %s256, %s245
        %s259 = sadd.s32 %s136, 5
        %s260 = sshra.s32 %s259, 7
        %s261 = sand.u32 %s259, 127
        %s262 = sadd.s32 %s260, %s30
        %s263 = smul.u32 %s262, 128
        %s264 = sshra.s32 %s259, 7
        %s265 = sand.u32 %s259, 127
        %s266 = sadd.s32 %s263, %s265
        %s267 = sld [smem:[#allocation5 + %s266]]
        %s268 = scalar_lea.hbm %s1, %s267
        %s269 = scalar_lea.vmem [#allocation2], 5
        %s270 = scalar_lea.sflag [#allocation3], 5
        // Predicated region
        $region49: #{tpu_custom_call.1} parent=23 // pred_check
          _
        $region50: #{tpu_custom_call.1} parent=23 // pred_check_branch
          %272 = sbr.rel target = $region52
        $region51: #{tpu_custom_call.1} parent=23 // pred_region
          %273 = sst [smem:[#allocation12]] [#allocation23]
          %274 = sst [smem:[#allocation13]] [#allocation22]
        $region52: #{tpu_custom_call.1} parent=23 // pred_fallthru
          _
        %276 = shalt.err (0)
        %s278 = sshll.u32 %s268, 4
        %s279 = int_to_ptr.hbm [resolvable:$true] %s278
        %s280 = sshll.u32 %s269, 4
        %s281 = int_to_ptr.vmem [resolvable:$true] %s280
        %283 = dma.hbm_to_vmem [thread:$0]  %s279, 16, %s281, %s270
        %s284 = sadd.s32 %s136, 6
        %s285 = sshra.s32 %s284, 7
        %s286 = sand.u32 %s284, 127
        %s287 = sadd.s32 %s285, %s30
        %s288 = smul.u32 %s287, 128
        %s289 = sshra.s32 %s284, 7
        %s290 = sand.u32 %s284, 127
        %s291 = sadd.s32 %s288, %s290
        %s292 = sld [smem:[#allocation5 + %s291]]
        %s293 = scalar_lea.hbm %s1, %s292
        %s294 = scalar_lea.vmem [#allocation2], 6
        %s295 = scalar_lea.sflag [#allocation3], 6
        // Predicated region
        $region53: #{tpu_custom_call.1} parent=23 // pred_check
          _
        $region54: #{tpu_custom_call.1} parent=23 // pred_check_branch
          %297 = sbr.rel target = $region56
        $region55: #{tpu_custom_call.1} parent=23 // pred_region
          %298 = sst [smem:[#allocation12]] [#allocation25]
          %299 = sst [smem:[#allocation13]] [#allocation24]
        $region56: #{tpu_custom_call.1} parent=23 // pred_fallthru
          _
        %301 = shalt.err (0)
        %s303 = sshll.u32 %s293, 4
        %s304 = int_to_ptr.hbm [resolvable:$true] %s303
        %s305 = sshll.u32 %s294, 4
        %s306 = int_to_ptr.vmem [resolvable:$true] %s305
        %308 = dma.hbm_to_vmem [thread:$0]  %s304, 16, %s306, %s295
        %s309 = sadd.s32 %s136, 7
        %s310 = sshra.s32 %s309, 7
        %s311 = sand.u32 %s309, 127
        %s312 = sadd.s32 %s310, %s30
        %s313 = smul.u32 %s312, 128
        %s314 = sshra.s32 %s309, 7
        %s315 = sand.u32 %s309, 127
        %s316 = sadd.s32 %s313, %s315
        %s317 = sld [smem:[#allocation5 + %s316]]
        %s318 = scalar_lea.hbm %s1, %s317
        %s319 = scalar_lea.vmem [#allocation2], 7
        %s320 = scalar_lea.sflag [#allocation3], 7
        // Predicated region
        $region57: #{tpu_custom_call.1} parent=23 // pred_check
          _
        $region58: #{tpu_custom_call.1} parent=23 // pred_check_branch
          %322 = sbr.rel target = $region60
        $region59: #{tpu_custom_call.1} parent=23 // pred_region
          %323 = sst [smem:[#allocation12]] [#allocation27]
          %324 = sst [smem:[#allocation13]] [#allocation26]
        $region60: #{tpu_custom_call.1} parent=23 // pred_fallthru
          _
        %326 = shalt.err (0)
        %s328 = sshll.u32 %s318, 4
        %s329 = int_to_ptr.hbm [resolvable:$true] %s328
        %s330 = sshll.u32 %s319, 4
        %s331 = int_to_ptr.vmem [resolvable:$true] %s330
        %333 = dma.hbm_to_vmem [thread:$0]  %s329, 16, %s331, %s320
        %s334 = smul.u32 1, 1
        %s335 = sshll.u32 %s334, 4
        %336 = dma.done [#allocation3], %s335
        %s337 = sshll.u32 %s334, 4
        %338 = dma.done %s170, %s337
        %s339 = sshll.u32 %s334, 4
        %340 = dma.done %s195, %s339
        %s341 = sshll.u32 %s334, 4
        %342 = dma.done %s220, %s341
        %s343 = sshll.u32 %s334, 4
        %344 = dma.done %s245, %s343
        %s345 = sshll.u32 %s334, 4
        %346 = dma.done %s270, %s345
        %s347 = sshll.u32 %s334, 4
        %348 = dma.done %s295, %s347
        %s349 = sshll.u32 %s334, 4
        %350 = dma.done %s320, %s349
        %v351 = vld [vmem:[#allocation2] sm:$0xff]
        %s352 = scalar_lea.vmem [#allocation6], %s136
        %v353 = vld [vmem:[%s352] sm:$0xff]
        %v354 = vadd.f32 %v351, %v353
        %355 = vst [vmem:[%s135] sm:$0xff] %v354
        %s356 = sand.u32 %s69, 1
        %s357 = scalar_lea.sflag [#allocation8], %s356
        %s358 = sand.u32 %s69, 1
        %s359 = smul.addr %s358, 8
        %s360 = scalar_lea.vmem [#allocation9], %s359
        // Predicated region
        $region61: #{tpu_custom_call.1} parent=23 // pred_check
          %p361 = pneg %p79
        $region62: #{tpu_custom_call.1} parent=23 // pred_check_branch
          %363 = sbr.rel (%p361) target = $region64
        $region63: #{tpu_custom_call.1} parent=23 // pred_region
          %365 = vsyncadd %s357, 0
          %s366 = sadd.s32 %s31, %s30
          %s367 = smul.addr %s366, 8
          %s368 = scalar_lea.hbm %s3, %s367
          %s370 = sshll.u32 %s360, 4
          %s371 = int_to_ptr.vmem [resolvable:$true] %s370
          %s372 = sshll.u32 %s368, 4
          %s373 = int_to_ptr.hbm [resolvable:$true] %s372
          %375 = dma.vmem_to_hbm [thread:$0]  %s371, 128, %s373, %s357
        $region64: #{tpu_custom_call.1} parent=23 // pred_fallthru
          _
      $region24: #{tpu_custom_call.1} parent=5 // pred_fallthru
        _
      %p376 = scmp.le.s32.totalorder 2, %s21
      // Predicated region
      $region65: #{tpu_custom_call.1} parent=5 // pred_check
        %p377 = pneg %p376
      $region66: #{tpu_custom_call.1} parent=5 // pred_check_branch
        %379 = sbr.rel (%p377) target = $region68
      $region67: #{tpu_custom_call.1} parent=5 // pred_region
        %s380 = ssub.s32 %s21, 2
        // Predicated region
        $region69: #{tpu_custom_call.1} parent=67 // pred_check
          %p381 = pneg %p85
        $region70: #{tpu_custom_call.1} parent=67 // pred_check_branch
          %383 = sbr.rel (%p381) target = $region72
        $region71: #{tpu_custom_call.1} parent=67 // pred_region
          %s384 = sand.u32 %s70, 1
          %s385 = scalar_lea.sflag [#allocation8], %s384
          %s386 = sand.u32 %s70, 1
          %s387 = smul.addr %s386, 8
          %s388 = scalar_lea.vmem [#allocation9], %s387
          %390 = dma.done %s385, 128
        $region72: #{tpu_custom_call.1} parent=67 // pred_fallthru
          _
      $region68: #{tpu_custom_call.1} parent=5 // pred_fallthru
        _
    $region6: #{tpu_custom_call.1} parent=1 // loop_footer
      %s25 = sadd.s32 1, %s21
    $region7: #{tpu_custom_call.1} parent=1 // loop_footer_branch
      %20 = sbr.rel target = $region3
    $region8: #{tpu_custom_call.1} parent=1 // loop_exit
      _
    %391 = vsyncpa [#allocation7], 1
    %s392 = scalar_lea.sflag [#allocation7], 1
    %393 = vsyncpa %s392, 1
    %394 = vsyncpa [#allocation8], 1
    %s395 = scalar_lea.sflag [#allocation8], 1
    %396 = vsyncpa %s395, 1
  %397 = vsyncmov [#allocation3]
  %s398 = vpop.sfrf %397
  %p399 = scmp.eq.s32.totalorder %s398, 0
  %p400 = pneg %p399
  %402 = shalt.err (%p400)
  %s403 = scalar_lea.sflag [#allocation3], 1
  %404 = vsyncmov %s403
  %s405 = vpop.sfrf %404
  %p406 = scmp.eq.s32.totalorder %s405, 0
  %p407 = pneg %p406
  %409 = shalt.err (%p407)
  %s410 = scalar_lea.sflag [#allocation3], 2
  %411 = vsyncmov %s410
  %s412 = vpop.sfrf %411
  %p413 = scmp.eq.s32.totalorder %s412, 0
  %p414 = pneg %p413
  %416 = shalt.err (%p414)
  %s417 = scalar_lea.sflag [#allocation3], 3
  %418 = vsyncmov %s417
  %s419 = vpop.sfrf %418
  %p420 = scmp.eq.s32.totalorder %s419, 0
  %p421 = pneg %p420
  %423 = shalt.err (%p421)
  %s424 = scalar_lea.sflag [#allocation3], 4
  %425 = vsyncmov %s424
  %s426 = vpop.sfrf %425
  %p427 = scmp.eq.s32.totalorder %s426, 0
  %p428 = pneg %p427
  %430 = shalt.err (%p428)
  %s431 = scalar_lea.sflag [#allocation3], 5
  %432 = vsyncmov %s431
  %s433 = vpop.sfrf %432
  %p434 = scmp.eq.s32.totalorder %s433, 0
  %p435 = pneg %p434
  %437 = shalt.err (%p435)
  %s438 = scalar_lea.sflag [#allocation3], 6
  %439 = vsyncmov %s438
  %s440 = vpop.sfrf %439
  %p441 = scmp.eq.s32.totalorder %s440, 0
  %p442 = pneg %p441
  %444 = shalt.err (%p442)
  %s445 = scalar_lea.sflag [#allocation3], 7
  %446 = vsyncmov %s445
  %s447 = vpop.sfrf %446
  %p448 = scmp.eq.s32.totalorder %s447, 0
  %p449 = pneg %p448
  %451 = shalt.err (%p449)

</llo_original>
